<compile_context>
chip_gen: v6e
topology: v6e:2x2x1
jax: 0.10.0
libtpu: 0.0.40
codegen_flags: <defaults>
</compile_context>

<pallas_src>
import jax
import jax.numpy as jnp
from jax.experimental import pallas as pl
from jax.experimental.pallas import tpu as pltpu

# ----- module hyper-parameters (match SelfAttention_Head defaults) -----
EMBED_N = 32      # D
HEAD_SIZE = 32    # hs
BLOCK_SIZE = 8    # T (context length / causal-mask size)


def attention_head_kernel(x_ref, wqkv_ref, out_ref):
    bblk, t, d = x_ref.shape
    hs = wqkv_ref.shape[1] // 3

    x = x_ref[...]                                    # (Bblk, T, D) f32
    xf = x.reshape(bblk * t, d)                       # big-M for the MXU

    # Fused QKV projection: one matmul instead of three tiny ones.
    qkv = jnp.dot(xf, wqkv_ref[...],
                  preferred_element_type=jnp.float32)  # (Bblk*T, 3*hs)

    scale = jnp.float32(hs ** -0.5)
    # Pre-scale q: identical to scaling the (masked) scores, cheaper.
    q = (qkv[:, 0 * hs:1 * hs] * scale).reshape(bblk, t, hs)
    k = qkv[:, 1 * hs:2 * hs].reshape(bblk, t, hs)
    v = qkv[:, 2 * hs:3 * hs].reshape(bblk, t, hs)

    # Reference convention: weight = k @ q^T  ->  s[b, i, j] = k_i . q_j
    s = jnp.einsum("bid,bjd->bij", k, q,
                   preferred_element_type=jnp.float32)  # (Bblk, T, T)

    # Causal keep-mask == (tril != 0): keep j <= i (diagonal kept -> no NaN rows).
    row = jax.lax.broadcasted_iota(jnp.int32, (t, t), 0)
    col = jax.lax.broadcasted_iota(jnp.int32, (t, t), 1)
    keep = (col <= row)[None, :, :]
    s = jnp.where(keep, s, -jnp.inf)

    # Numerically-stable softmax along the last dim; reciprocal on the EUP.
    s = s - jnp.max(s, axis=-1, keepdims=True)
    e = jnp.exp(s)
    w = e * pl.reciprocal(jnp.sum(e, axis=-1, keepdims=True), approx=True)

    # dropout(p=0.0) is the identity.
    att = jnp.einsum("bij,bjd->bid", w, v,
                     preferred_element_type=jnp.float32)  # (Bblk, T, hs)

    out_ref[...] = att.astype(out_ref.dtype)


def _pick_batch_block(B, cap=256):
    """Largest divisor of B that is <= cap (whole batch when B <= cap)."""
    bblk = min(B, cap)
    while B % bblk:
        bblk -= 1
    return bblk


def self_attention_head(x, wq, wk, wv, *, batch_block_cap=256):
    """x: [B, T, D] f32. wq/wk/wv: [D, hs] (stored as (in, out): y = x @ W).
    Returns attention output [B, T, hs]."""
    B, T, D = x.shape
    hs = wq.shape[1]
    x = x.astype(jnp.float32)
    wqkv = jnp.concatenate([wq, wk, wv], axis=1).astype(jnp.float32)  # (D, 3*hs)

    bblk = _pick_batch_block(B, batch_block_cap)
    grid = (B // bblk,)

    out = pl.pallas_call(
        attention_head_kernel,
        out_shape=jax.ShapeDtypeStruct((B, T, hs), jnp.float32),
        grid_spec=pltpu.PrefetchScalarGridSpec(
            num_scalar_prefetch=0,
            grid=grid,
            in_specs=[
                pl.BlockSpec((bblk, T, D), lambda b: (b, 0, 0)),
                pl.BlockSpec((D, 3 * hs), lambda b: (0, 0)),
            ],
            out_specs=pl.BlockSpec((bblk, T, hs), lambda b: (b, 0, 0)),
        ),
        compiler_params=pltpu.CompilerParams(
            # Batch steps are independent -> shard across TCs where available
            # (v7x); a no-op on single-TC v5e/v6e.
            dimension_semantics=("parallel",),
            # Safe on all generations (<= scoped/physical budgets), and gives
            # headroom for large batch blocks on v5e's 16 MiB scoped default.
            vmem_limit_bytes=32 * 1024 * 1024,
        ),
    )(x, wqkv)
    return out


# ---------------------------------------------------------------------------
# pure-JAX reference (same math as the PyTorch module) for a correctness check
# ---------------------------------------------------------------------------
def reference_forward(x, wq, wk, wv):
    T = x.shape[1]
    hs = wq.shape[1]
    with jax.default_matmul_precision("highest"):
        q = x @ wq
        k = x @ wk
        v = x @ wv
        s = jnp.einsum("bid,bjd->bij", k, q)          # k @ q^T
        tril = jnp.tril(jnp.ones((T, T), jnp.float32))
        s = jnp.where(tril == 0, -jnp.inf, s)
        w = jax.nn.softmax(s * (hs ** -0.5), axis=-1)
        return jnp.einsum("bij,bjd->bid", w, v)


if __name__ == "__main__":
    key = jax.random.PRNGKey(0)
    kx, kq, kk, kv = jax.random.split(key, 4)

    B, T, D, HS = 2, BLOCK_SIZE, EMBED_N, HEAD_SIZE
    x = jax.random.normal(kx, (B, T, D), jnp.float32)

    # nn.Linear-style init: U(-1/sqrt(in), 1/sqrt(in)), stored as (in, out).
    def winit(k, shape):
        bound = 1.0 / jnp.sqrt(jnp.float32(shape[0]))
        return jax.random.uniform(k, shape, jnp.float32, -bound, bound)

    wq = winit(kq, (D, HS))
    wk = winit(kk, (D, HS))
    wv = winit(kv, (D, HS))

    out = self_attention_head(x, wq, wk, wv)
    out = jax.block_until_ready(out)

    ref = reference_forward(x, wq, wk, wv)
    assert out.shape == (B, T, HS)
    max_err = jnp.max(jnp.abs(out - ref))
    assert jnp.allclose(out, ref, atol=2e-3, rtol=2e-3), f"max abs err {max_err}"

    print("KERNEL_OK")
</pallas_src>

<mosaic_0001>
module attributes {stable_mosaic.version = 11 : i64} {
  func.func @attention_head_kernel(%arg0: i32, %arg1: memref<2x8x32xf32, #tpu.memory_space<vmem>>, %arg2: memref<32x96xf32, #tpu.memory_space<vmem>>, %arg3: memref<2x8x32xf32, #tpu.memory_space<vmem>>) attributes {dimension_semantics = [#tpu.dimension_semantics<parallel>], iteration_bounds = array<i64: 1>, scalar_prefetch = 0 : i64, scratch_operands = 0 : i64, tpu.core_type = #tpu.core_type<tc>, window_params = [{transform_indices = @transform_0, window_bounds = array<i64: 2, 8, 32>}, {pipeline_mode = #tpu.pipeline_mode<synchronous>, transform_indices = @transform_1, window_bounds = array<i64: 32, 96>}, {transform_indices = @transform_2, window_bounds = array<i64: 2, 8, 32>}]} {
    %c0 = arith.constant 0 : index
    %c0_0 = arith.constant 0 : index
    %c0_1 = arith.constant 0 : index
    %0 = vector.load %arg1[%c0, %c0_0, %c0_1] : memref<2x8x32xf32, #tpu.memory_space<vmem>>, vector<2x8x32xf32>
    %1 = vector.shape_cast %0 : vector<2x8x32xf32> to vector<16x32xf32>
    %c0_2 = arith.constant 0 : index
    %c0_3 = arith.constant 0 : index
    %2 = vector.load %arg2[%c0_2, %c0_3] : memref<32x96xf32, #tpu.memory_space<vmem>>, vector<32x96xf32>
    %cst = arith.constant dense<0.000000e+00> : vector<16x96xf32>
    %3 = tpu.matmul %1, %2, %cst {dimension_numbers = #tpu.dot_dimension_numbers<[1], [0], [0], [1], [0, 0, 1, 1], [], []>} : vector<16x32xf32>, vector<32x96xf32>, vector<16x96xf32> -> vector<16x96xf32>
    %4 = vector.extract_strided_slice %3 {offsets = [0, 0], sizes = [16, 32], strides = [1, 1]} : vector<16x96xf32> to vector<16x32xf32>
    %cst_4 = arith.constant 0.176776692 : f32
    %5 = vector.broadcast %cst_4 : f32 to vector<16x32xf32>
    %6 = arith.mulf %4, %5 : vector<16x32xf32>
    %7 = vector.shape_cast %6 : vector<16x32xf32> to vector<2x8x32xf32>
    %8 = vector.extract_strided_slice %3 {offsets = [0, 32], sizes = [16, 32], strides = [1, 1]} : vector<16x96xf32> to vector<16x32xf32>
    %9 = vector.shape_cast %8 : vector<16x32xf32> to vector<2x8x32xf32>
    %10 = vector.extract_strided_slice %3 {offsets = [0, 64], sizes = [16, 32], strides = [1, 1]} : vector<16x96xf32> to vector<16x32xf32>
    %11 = vector.shape_cast %10 : vector<16x32xf32> to vector<2x8x32xf32>
    "tpu.trace_start"() <{level = 10 : i32, message = "bid,bjd->bij"}> : () -> ()
    %cst_5 = arith.constant dense<0.000000e+00> : vector<2x8x8xf32>
    %12 = tpu.matmul %9, %7, %cst_5 {dimension_numbers = #tpu.dot_dimension_numbers<[2], [2], [1], [1], [0, 0, 0, 1, 1, 1], [0], [0]>} : vector<2x8x32xf32>, vector<2x8x32xf32>, vector<2x8x8xf32> -> vector<2x8x8xf32>
    "tpu.trace_stop"() : () -> ()
    %13 = tpu.iota {dimensions = array<i32: 0>} : vector<8x8xi32>
    %14 = tpu.iota {dimensions = array<i32: 1>} : vector<8x8xi32>
    %15 = arith.cmpi sle, %14, %13 : vector<8x8xi32>
    %16 = vector.shape_cast %15 : vector<8x8xi1> to vector<1x8x8xi1>
    %cst_6 = arith.constant 0xFF800000 : f32
    %17 = vector.shape_cast %16 : vector<1x8x8xi1> to vector<1x8x8xi1>
    %18 = vector.broadcast %17 : vector<1x8x8xi1> to vector<2x8x8xi1>
    %19 = vector.broadcast %cst_6 : f32 to vector<2x8x8xf32>
    %20 = arith.select %18, %12, %19 : vector<2x8x8xi1>, vector<2x8x8xf32>
    %cst_7 = arith.constant dense<0xFF800000> : vector<2x8xf32>
    %21 = vector.multi_reduction <maximumf>, %20, %cst_7 [2] : vector<2x8x8xf32> to vector<2x8xf32>
    %22 = vector.shape_cast %21 : vector<2x8xf32> to vector<2x8x1xf32>
    %23 = vector.broadcast %22 : vector<2x8x1xf32> to vector<2x8x8xf32>
    %24 = arith.subf %20, %23 : vector<2x8x8xf32>
    %25 = math.exp %24 : vector<2x8x8xf32>
    %cst_8 = arith.constant dense<0.000000e+00> : vector<2x8xf32>
    %26 = vector.multi_reduction <add>, %25, %cst_8 [2] : vector<2x8x8xf32> to vector<2x8xf32>
    %27 = vector.shape_cast %26 : vector<2x8xf32> to vector<2x8x1xf32>
    %28 = tpu.reciprocal %27 {approx = true} : vector<2x8x1xf32> -> vector<2x8x1xf32>
    %29 = vector.broadcast %28 : vector<2x8x1xf32> to vector<2x8x8xf32>
    %30 = arith.mulf %25, %29 : vector<2x8x8xf32>
    "tpu.trace_start"() <{level = 10 : i32, message = "bij,bjd->bid"}> : () -> ()
    %cst_9 = arith.constant dense<0.000000e+00> : vector<2x8x32xf32>
    %31 = tpu.matmul %30, %11, %cst_9 {dimension_numbers = #tpu.dot_dimension_numbers<[2], [1], [1], [2], [0, 0, 0, 1, 1, 2], [0], [0]>} : vector<2x8x8xf32>, vector<2x8x32xf32>, vector<2x8x32xf32> -> vector<2x8x32xf32>
    "tpu.trace_stop"() : () -> ()
    %c0_10 = arith.constant 0 : index
    %c0_11 = arith.constant 0 : index
    %c0_12 = arith.constant 0 : index
    %32 = vector.load %arg3[%c0_10, %c0_11, %c0_12] : memref<2x8x32xf32, #tpu.memory_space<vmem>>, vector<2x8x32xf32>
    tpu.vector_store %arg3[%c0_10, %c0_11, %c0_12], %31 {strides = array<i32>} : memref<2x8x32xf32, #tpu.memory_space<vmem>>, vector<2x8x32xf32>,
    return
  }
  func.func @transform_0(%arg0: i32) -> (i32, i32, i32) {
    %c0_i32 = arith.constant 0 : i32
    %c0_i32_0 = arith.constant 0 : i32
    %c0_i32_1 = arith.constant 0 : i32
    return %arg0, %c0_i32, %c0_i32_0 : i32, i32, i32
  }
  func.func @transform_1(%arg0: i32) -> (i32, i32) {
    %c0_i32 = arith.constant 0 : i32
    %c0_i32_0 = arith.constant 0 : i32
    %c0_i32_1 = arith.constant 0 : i32
    return %c0_i32, %c0_i32_0 : i32, i32
  }
  func.func @transform_2(%arg0: i32) -> (i32, i32, i32) {
    %c0_i32 = arith.constant 0 : i32
    %c0_i32_0 = arith.constant 0 : i32
    %c0_i32_1 = arith.constant 0 : i32
    return %arg0, %c0_i32, %c0_i32_0 : i32, i32, i32
  }
}

</mosaic_0001>

<llo_original>
// kernel: tpu_custom_call.1
$region0: #{tpu_custom_call.1}
  #allocation0 [shape = 'u32[]', space=smem, size = 0x4, offset = 0x4, fixed_abs, tag = 'smem constant byte address 0x4 - core index']
  #allocation1 [shape = 'u32[144,128]{1,0:T(1,128)}', space=vmem, size = 0x12000, scoped, tag = 'internal scratch']
  %s0 = inlined_call_operand.hbm [shape: f32[2,8,32], index: 0, kind: input, shape index: {}]
  %s1 = inlined_call_operand.hbm [shape: f32[32,96], index: 1, kind: input, shape index: {}]
  %s2 = inlined_call_operand.hbm [shape: f32[2,8,32], index: 2, kind: output, shape index: {}]
  %s3 = sld [smem:[#allocation0]]
  $region26: #{tpu_custom_call.1} parent=0
    _
  %s5 = ssub.s32 1, %s3
  %s6 = scalar_select 0, %s5, %s3
  $region1: #{tpu_custom_call.1} parent=0
    #allocation2 [shape = 'u8[8192]{0}', space=vmem, size = 0x2000, scoped, tag = 'input window, operand 0, single buffered']
    #allocation3 [shape = 's32[1]{0}', space=sflag, size = 0x4, scoped, tag = 'scoped memory for tpu_custom_call.1']
    #allocation4 [shape = 's32[1]{0}', space=sflag, size = 0x4, scoped, tag = 'scoped memory for tpu_custom_call.1']
    #allocation5 [shape = 'u8[16384]{0}', space=vmem, size = 0x4000, scoped, tag = 'input window, operand 1, single buffered']
    #allocation6 [shape = 's32[1]{0}', space=sflag, size = 0x4, scoped, tag = 'scoped memory for tpu_custom_call.1']
    #allocation7 [shape = 'u8[8192]{0}', space=vmem, size = 0x2000, scoped, tag = 'output window, operand 0, single buffered']
    %7 = vsyncpa [#allocation3], 0
    %8 = vsyncpa [#allocation6], 0
    %9 = vsyncpa [#allocation4], 0
    // Predicated region
    $region2: #{tpu_custom_call.1} parent=1 // pred_check
      _
    $region3: #{tpu_custom_call.1} parent=1 // pred_check_branch
      %11 = sbr.rel (0) target = $region5
    $region4: #{tpu_custom_call.1} parent=1 // pred_region
      %s13 = ssub.s32 256, 256
      %14 = vsyncadd [#allocation3], %s13
      %s15 = sshll.u32 [#allocation2], 4
      %s16 = int_to_ptr.vmem [resolvable:$true] %s15
      %21 = dma.hbm_to_vmem [thread:$0]  %s0, 256, %s16, [#allocation3], 128, 128, 8
    $region5: #{tpu_custom_call.1} parent=1 // pred_fallthru
      _
    // Predicated region
    $region6: #{tpu_custom_call.1} parent=1 // pred_check
      _
    $region7: #{tpu_custom_call.1} parent=1 // pred_check_branch
      %23 = sbr.rel (0) target = $region9
    $region8: #{tpu_custom_call.1} parent=1 // pred_region
      %s25 = ssub.s32 512, 512
      %26 = vsyncadd [#allocation6], %s25
      %s27 = sshll.u32 [#allocation5], 4
      %s28 = int_to_ptr.vmem [resolvable:$true] %s27
      %33 = dma.hbm_to_vmem [thread:$0]  %s1, 512, %s28, [#allocation6], 128, 128, 8
    $region9: #{tpu_custom_call.1} parent=1 // pred_fallthru
      _
    // Predicated region
    $region10: #{tpu_custom_call.1} parent=1 // pred_check
      _
    $region11: #{tpu_custom_call.1} parent=1 // pred_check_branch
      %35 = sbr.rel (0) target = $region13
    $region12: #{tpu_custom_call.1} parent=1 // pred_region
      %36 = dma.done [#allocation3], 256
    $region13: #{tpu_custom_call.1} parent=1 // pred_fallthru
      _
    // Predicated region
    $region14: #{tpu_custom_call.1} parent=1 // pred_check
      _
    $region15: #{tpu_custom_call.1} parent=1 // pred_check_branch
      %38 = sbr.rel (0) target = $region17
    $region16: #{tpu_custom_call.1} parent=1 // pred_region
      %39 = dma.done [#allocation6], 512
    $region17: #{tpu_custom_call.1} parent=1 // pred_fallthru
      _
    %v40 = vld [vmem:[#allocation2] sm:$0xff]
    %v41 = vld [vmem:[#allocation2 + $0x8] sm:$0xff]
    %v42 = vld [vmem:[#allocation5] sm:$0xff]
    %v43 = vld [vmem:[#allocation5 + $0x8] sm:$0xff]
    %v44 = vld [vmem:[#allocation5 + $0x10] sm:$0xff]
    %v45 = vld [vmem:[#allocation5 + $0x18] sm:$0xff]
    %vm46 = vcmask 261120
    %v48 = vsel %vm46, %v40, 0
    %v51 = vsel %vm46, %v41, 0
    %53 = vmatprep.subr.mxu0 0.0
    %54 = vmatpush1.msra.mxu0 0.0
    %55 = vmatprep.subr.mxu0 0.0
    %56 = vmatpush1.msra.mxu0 0.0
    %57 = vmatprep.subr.mxu0 0.0
    %58 = vmatpush1.msra.mxu0 0.0
    %59 = vmatprep.subr.mxu0 0.0
    %60 = vmatpush1.msra.mxu0 0.0
    %61 = vmatprep.subr.mxu0 0.0
    %62 = vmatpush1.msra.mxu0 0.0
    %63 = vmatprep.subr.mxu0 0.0
    %64 = vmatpush1.msra.mxu0 0.0
    %65 = vmatprep.subr.mxu0 0.0
    %66 = vmatpush1.msra.mxu0 0.0
    %67 = vmatprep.subr.mxu0 0.0
    %68 = vmatpush1.msra.mxu0 0.0
    %69 = vmatprep.subr.mxu0 0.0
    %70 = vmatpush1.msra.mxu0 0.0
    %71 = vmatprep.subr.mxu0 0.0
    %72 = vmatpush1.msra.mxu0 0.0
    %73 = vmatprep.subr.mxu0 0.0
    %74 = vmatpush1.msra.mxu0 0.0
    %75 = vmatprep.subr.mxu0 0.0
    %76 = vmatpush1.msra.mxu0 0.0
    %77 = vmatprep.subr.mxu0 0.0
    %78 = vmatpush1.msra.mxu0 %v45
    %79 = vmatprep.subr.mxu0 0.0
    %80 = vmatpush1.msra.mxu0 %v44
    %81 = vmatprep.subr.mxu0 0.0
    %82 = vmatpush1.msra.mxu0 %v43
    %83 = vmatprep.subr.mxu0 0.0
    %84 = vmatpush1.msra.mxu0 %v42
    %85 = vmatprep.subr.mxu0 0.0
    %86 = vmatpush2.msra.mxu0 0.0
    %87 = vmatprep.subr.mxu0 0.0
    %88 = vmatpush2.msra.mxu0 0.0
    %89 = vmatprep.subr.mxu0 0.0
    %90 = vmatpush2.msra.mxu0 0.0
    %91 = vmatprep.subr.mxu0 0.0
    %92 = vmatpush2.msra.mxu0 0.0
    %93 = vmatprep.subr.mxu0 0.0
    %94 = vmatpush2.msra.mxu0 0.0
    %95 = vmatprep.subr.mxu0 0.0
    %96 = vmatpush2.msra.mxu0 0.0
    %97 = vmatprep.subr.mxu0 0.0
    %98 = vmatpush2.msra.mxu0 0.0
    %99 = vmatprep.subr.mxu0 0.0
    %100 = vmatpush2.msra.mxu0 0.0
    %101 = vmatprep.subr.mxu0 0.0
    %102 = vmatpush2.msra.mxu0 0.0
    %103 = vmatprep.subr.mxu0 0.0
    %104 = vmatpush2.msra.mxu0 0.0
    %105 = vmatprep.subr.mxu0 0.0
    %106 = vmatpush2.msra.mxu0 0.0
    %107 = vmatprep.subr.mxu0 0.0
    %108 = vmatpush2.msra.mxu0 0.0
    %109 = vmatprep.subr.mxu0 0.0
    %110 = vmatpush2.msra.mxu0 0.0
    %111 = vmatprep.subr.mxu0 0.0
    %112 = vmatpush2.msra.mxu0 0.0
    %113 = vmatprep.subr.mxu0 0.0
    %114 = vmatpush2.msra.mxu0 0.0
    %115 = vmatprep.subr.mxu0 0.0
    %116 = vmatpush2.msra.mxu0 0.0
    %117 = vmatprep.mubr.f32.mxu0 0.0
    %118 = vmatmul.mubr.f32.gmra.mxu0 %v48
    %v119 = vpop.f32.mrf.mxu0
    %v120 = vadd.f32 0.0, %v119
    %v121 = vpop.f32.mrf.mxu0
    %122 = vmatprep.mubr.f32.mxu0 0.0
    %123 = vmatmul.mubr.f32.gmra.mxu0 %v51
    %v124 = vpop.f32.mrf.mxu0
    %v125 = vadd.f32 0.0, %v124
    %v126 = vpop.f32.mrf.mxu0
    %127 = vdwg.mxu0
    %v128 = vmul.f32 %v120, 0.17677669
    %v129 = vmul.f32 %v125, 0.17677669
    %131 = vrot.lane.b32.xlu0 %v120, 96
    %v132 = vpop.permute.xlu0 %131
    %v133 = vsel %vm46, %v132, 0
    %v136 = vsel %vm46, %v128, 0
    %138 = vmatprep.subr.mxu0 0.0
    %139 = vmatpush1.xpose.msra.mxu0 0.0
    %140 = vmatprep.subr.mxu0 0.0
    %141 = vmatpush1.xpose.msra.mxu0 0.0
    %142 = vmatprep.subr.mxu0 0.0
    %143 = vmatpush1.xpose.msra.mxu0 0.0
    %144 = vmatprep.subr.mxu0 0.0
    %145 = vmatpush1.xpose.msra.mxu0 0.0
    %146 = vmatprep.subr.mxu0 0.0
    %147 = vmatpush1.xpose.msra.mxu0 0.0
    %148 = vmatprep.subr.mxu0 0.0
    %149 = vmatpush1.xpose.msra.mxu0 0.0
    %150 = vmatprep.subr.mxu0 0.0
    %151 = vmatpush1.xpose.msra.mxu0 0.0
    %152 = vmatprep.subr.mxu0 0.0
    %153 = vmatpush1.xpose.msra.mxu0 0.0
    %154 = vmatprep.subr.mxu0 0.0
    %155 = vmatpush1.xpose.msra.mxu0 0.0
    %156 = vmatprep.subr.mxu0 0.0
    %157 = vmatpush1.xpose.msra.mxu0 0.0
    %158 = vmatprep.subr.mxu0 0.0
    %159 = vmatpush1.xpose.msra.mxu0 0.0
    %160 = vmatprep.subr.mxu0 0.0
    %161 = vmatpush1.xpose.msra.mxu0 0.0
    %162 = vmatprep.subr.mxu0 0.0
    %163 = vmatpush1.xpose.msra.mxu0 0.0
    %164 = vmatprep.subr.mxu0 0.0
    %165 = vmatpush1.xpose.msra.mxu0 0.0
    %166 = vmatprep.subr.mxu0 0.0
    %167 = vmatpush1.xpose.msra.mxu0 0.0
    %168 = vmatprep.subr.mxu0 0.0
    %169 = vmatpush1.xpose.msra.mxu0 %v136
    %170 = vmatprep.subr.mxu0 0.0
    %171 = vmatpush2.xpose.msra.mxu0 0.0
    %172 = vmatprep.subr.mxu0 0.0
    %173 = vmatpush2.xpose.msra.mxu0 0.0
    %174 = vmatprep.subr.mxu0 0.0
    %175 = vmatpush2.xpose.msra.mxu0 0.0
    %176 = vmatprep.subr.mxu0 0.0
    %177 = vmatpush2.xpose.msra.mxu0 0.0
    %178 = vmatprep.subr.mxu0 0.0
    %179 = vmatpush2.xpose.msra.mxu0 0.0
    %180 = vmatprep.subr.mxu0 0.0
    %181 = vmatpush2.xpose.msra.mxu0 0.0
    %182 = vmatprep.subr.mxu0 0.0
    %183 = vmatpush2.xpose.msra.mxu0 0.0
    %184 = vmatprep.subr.mxu0 0.0
    %185 = vmatpush2.xpose.msra.mxu0 0.0
    %186 = vmatprep.subr.mxu0 0.0
    %187 = vmatpush2.xpose.msra.mxu0 0.0
    %188 = vmatprep.subr.mxu0 0.0
    %189 = vmatpush2.xpose.msra.mxu0 0.0
    %190 = vmatprep.subr.mxu0 0.0
    %191 = vmatpush2.xpose.msra.mxu0 0.0
    %192 = vmatprep.subr.mxu0 0.0
    %193 = vmatpush2.xpose.msra.mxu0 0.0
    %194 = vmatprep.subr.mxu0 0.0
    %195 = vmatpush2.xpose.msra.mxu0 0.0
    %196 = vmatprep.subr.mxu0 0.0
    %197 = vmatpush2.xpose.msra.mxu0 0.0
    %198 = vmatprep.subr.mxu0 0.0
    %199 = vmatpush2.xpose.msra.mxu0 0.0
    %200 = vmatprep.subr.mxu0 0.0
    %201 = vmatpush2.xpose.msra.mxu0 0.0
    %202 = vmatprep.mubr.f32.mxu0 0.0
    %203 = vmatmul.mubr.f32.gmra.mxu0 %v133
    %v204 = vpop.f32.mrf.mxu0
    %v205 = vadd.f32 0.0, %v204
    %v206 = vpop.f32.mrf.mxu0
    %207 = vdwg.mxu0
    %209 = vrot.lane.b32.xlu0 %v125, 96
    %v210 = vpop.permute.xlu0 %209
    %v211 = vsel %vm46, %v210, 0
    %v214 = vsel %vm46, %v129, 0
    %216 = vmatprep.subr.mxu0 0.0
    %217 = vmatpush1.xpose.msra.mxu0 0.0
    %218 = vmatprep.subr.mxu0 0.0
    %219 = vmatpush1.xpose.msra.mxu0 0.0
    %220 = vmatprep.subr.mxu0 0.0
    %221 = vmatpush1.xpose.msra.mxu0 0.0
    %222 = vmatprep.subr.mxu0 0.0
    %223 = vmatpush1.xpose.msra.mxu0 0.0
    %224 = vmatprep.subr.mxu0 0.0
    %225 = vmatpush1.xpose.msra.mxu0 0.0
    %226 = vmatprep.subr.mxu0 0.0
    %227 = vmatpush1.xpose.msra.mxu0 0.0
    %228 = vmatprep.subr.mxu0 0.0
    %229 = vmatpush1.xpose.msra.mxu0 0.0
    %230 = vmatprep.subr.mxu0 0.0
    %231 = vmatpush1.xpose.msra.mxu0 0.0
    %232 = vmatprep.subr.mxu0 0.0
    %233 = vmatpush1.xpose.msra.mxu0 0.0
    %234 = vmatprep.subr.mxu0 0.0
    %235 = vmatpush1.xpose.msra.mxu0 0.0
    %236 = vmatprep.subr.mxu0 0.0
    %237 = vmatpush1.xpose.msra.mxu0 0.0
    %238 = vmatprep.subr.mxu0 0.0
    %239 = vmatpush1.xpose.msra.mxu0 0.0
    %240 = vmatprep.subr.mxu0 0.0
    %241 = vmatpush1.xpose.msra.mxu0 0.0
    %242 = vmatprep.subr.mxu0 0.0
    %243 = vmatpush1.xpose.msra.mxu0 0.0
    %244 = vmatprep.subr.mxu0 0.0
    %245 = vmatpush1.xpose.msra.mxu0 0.0
    %246 = vmatprep.subr.mxu0 0.0
    %247 = vmatpush1.xpose.msra.mxu0 %v214
    %248 = vmatprep.subr.mxu0 0.0
    %249 = vmatpush2.xpose.msra.mxu0 0.0
    %250 = vmatprep.subr.mxu0 0.0
    %251 = vmatpush2.xpose.msra.mxu0 0.0
    %252 = vmatprep.subr.mxu0 0.0
    %253 = vmatpush2.xpose.msra.mxu0 0.0
    %254 = vmatprep.subr.mxu0 0.0
    %255 = vmatpush2.xpose.msra.mxu0 0.0
    %256 = vmatprep.subr.mxu0 0.0
    %257 = vmatpush2.xpose.msra.mxu0 0.0
    %258 = vmatprep.subr.mxu0 0.0
    %259 = vmatpush2.xpose.msra.mxu0 0.0
    %260 = vmatprep.subr.mxu0 0.0
    %261 = vmatpush2.xpose.msra.mxu0 0.0
    %262 = vmatprep.subr.mxu0 0.0
    %263 = vmatpush2.xpose.msra.mxu0 0.0
    %264 = vmatprep.subr.mxu0 0.0
    %265 = vmatpush2.xpose.msra.mxu0 0.0
    %266 = vmatprep.subr.mxu0 0.0
    %267 = vmatpush2.xpose.msra.mxu0 0.0
    %268 = vmatprep.subr.mxu0 0.0
    %269 = vmatpush2.xpose.msra.mxu0 0.0
    %270 = vmatprep.subr.mxu0 0.0
    %271 = vmatpush2.xpose.msra.mxu0 0.0
    %272 = vmatprep.subr.mxu0 0.0
    %273 = vmatpush2.xpose.msra.mxu0 0.0
    %274 = vmatprep.subr.mxu0 0.0
    %275 = vmatpush2.xpose.msra.mxu0 0.0
    %276 = vmatprep.subr.mxu0 0.0
    %277 = vmatpush2.xpose.msra.mxu0 0.0
    %278 = vmatprep.subr.mxu0 0.0
    %279 = vmatpush2.xpose.msra.mxu0 0.0
    %280 = vmatprep.mubr.f32.mxu0 0.0
    %281 = vmatmul.mubr.f32.gmra.mxu0 %v211
    %v282 = vpop.f32.mrf.mxu0
    %v283 = vadd.f32 0.0, %v282
    %v284 = vpop.f32.mrf.mxu0
    %285 = vdwg.mxu0
    %v286 = vlaneseq
    %v287 = vshrl.u32 %v286, 7
    %v288 = vlaneseq
    %v289 = vand.u32 %v288, 127
    %vm290 = vcmp.le.s32.totalorder %v289, %v287
    %v291 = vsel %vm290, 1, 0
    %vm292 = vcmp.eq.s32.totalorder %v291, 1
    %v293 = vsel %vm292, %v205, -inf
    %v294 = vsel %vm292, %v283, -inf
    %vm295 = vcmask 64512
    %v296 = vsel %vm295, %v293, -inf
    %297 = vmax.xlane.f32.xlu0 %v296
    %v298 = vpop.xlane.xlu0 %297
    %v299 = vsel %vm295, %v294, -inf
    %300 = vmax.xlane.f32.xlu0 %v299
    %v301 = vpop.xlane.xlu0 %300
    %v302 = vsub.f32 %v293, %v298
    %v303 = vsub.f32 %v294, %v301
    %v304 = vmul.f32 %v302, 1.442695
    %v305 = vpow.pop %v304
    %v306 = vmul.f32 %v303, 1.442695
    %v307 = vpow.pop %v306
    %v308 = vsel %vm295, %v305, 0.0
    %309 = vadd.xlane.f32.xlu0 %v308
    %v310 = vpop.xlane.xlu0 %309
    %v311 = vsel %vm295, %v307, 0.0
    %312 = vadd.xlane.f32.xlu0 %v311
    %v313 = vpop.xlane.xlu0 %312
    %v314 = vrcp.pop %v310
    %v315 = vrcp.pop %v313
    %v316 = vmul.f32 %v305, %v314
    %v317 = vmul.f32 %v307, %v315
    %318 = vrot.lane.b32.xlu0 %v120, 64
    %v319 = vpop.permute.xlu0 %318
    %v322 = vsel %vm295, %v316, 0
    %324 = vmatprep.subr.mxu0 0.0
    %325 = vmatpush1.msra.mxu0 0.0
    %326 = vmatprep.subr.mxu0 0.0
    %327 = vmatpush1.msra.mxu0 0.0
    %328 = vmatprep.subr.mxu0 0.0
    %329 = vmatpush1.msra.mxu0 0.0
    %330 = vmatprep.subr.mxu0 0.0
    %331 = vmatpush1.msra.mxu0 0.0
    %332 = vmatprep.subr.mxu0 0.0
    %333 = vmatpush1.msra.mxu0 0.0
    %334 = vmatprep.subr.mxu0 0.0
    %335 = vmatpush1.msra.mxu0 0.0
    %336 = vmatprep.subr.mxu0 0.0
    %337 = vmatpush1.msra.mxu0 0.0
    %338 = vmatprep.subr.mxu0 0.0
    %339 = vmatpush1.msra.mxu0 0.0
    %340 = vmatprep.subr.mxu0 0.0
    %341 = vmatpush1.msra.mxu0 0.0
    %342 = vmatprep.subr.mxu0 0.0
    %343 = vmatpush1.msra.mxu0 0.0
    %344 = vmatprep.subr.mxu0 0.0
    %345 = vmatpush1.msra.mxu0 0.0
    %346 = vmatprep.subr.mxu0 0.0
    %347 = vmatpush1.msra.mxu0 0.0
    %348 = vmatprep.subr.mxu0 0.0
    %349 = vmatpush1.msra.mxu0 0.0
    %350 = vmatprep.subr.mxu0 0.0
    %351 = vmatpush1.msra.mxu0 0.0
    %352 = vmatprep.subr.mxu0 0.0
    %353 = vmatpush1.msra.mxu0 0.0
    %354 = vmatprep.subr.mxu0 0.0
    %355 = vmatpush1.msra.mxu0 %v319
    %356 = vmatprep.subr.mxu0 0.0
    %357 = vmatpush2.msra.mxu0 0.0
    %358 = vmatprep.subr.mxu0 0.0
    %359 = vmatpush2.msra.mxu0 0.0
    %360 = vmatprep.subr.mxu0 0.0
    %361 = vmatpush2.msra.mxu0 0.0
    %362 = vmatprep.subr.mxu0 0.0
    %363 = vmatpush2.msra.mxu0 0.0
    %364 = vmatprep.subr.mxu0 0.0
    %365 = vmatpush2.msra.mxu0 0.0
    %366 = vmatprep.subr.mxu0 0.0
    %367 = vmatpush2.msra.mxu0 0.0
    %368 = vmatprep.subr.mxu0 0.0
    %369 = vmatpush2.msra.mxu0 0.0
    %370 = vmatprep.subr.mxu0 0.0
    %371 = vmatpush2.msra.mxu0 0.0
    %372 = vmatprep.subr.mxu0 0.0
    %373 = vmatpush2.msra.mxu0 0.0
    %374 = vmatprep.subr.mxu0 0.0
    %375 = vmatpush2.msra.mxu0 0.0
    %376 = vmatprep.subr.mxu0 0.0
    %377 = vmatpush2.msra.mxu0 0.0
    %378 = vmatprep.subr.mxu0 0.0
    %379 = vmatpush2.msra.mxu0 0.0
    %380 = vmatprep.subr.mxu0 0.0
    %381 = vmatpush2.msra.mxu0 0.0
    %382 = vmatprep.subr.mxu0 0.0
    %383 = vmatpush2.msra.mxu0 0.0
    %384 = vmatprep.subr.mxu0 0.0
    %385 = vmatpush2.msra.mxu0 0.0
    %386 = vmatprep.subr.mxu0 0.0
    %387 = vmatpush2.msra.mxu0 0.0
    %388 = vmatprep.mubr.f32.mxu0 0.0
    %389 = vmatmul.mubr.f32.gmra.mxu0 %v322
    %v390 = vpop.f32.mrf.mxu0
    %v391 = vadd.f32 0.0, %v390
    %v392 = vpop.f32.mrf.mxu0
    %393 = vdwg.mxu0
    %394 = vrot.lane.b32.xlu0 %v125, 64
    %v395 = vpop.permute.xlu0 %394
    %v398 = vsel %vm295, %v317, 0
    %400 = vmatprep.subr.mxu0 0.0
    %401 = vmatpush1.msra.mxu0 0.0
    %402 = vmatprep.subr.mxu0 0.0
    %403 = vmatpush1.msra.mxu0 0.0
    %404 = vmatprep.subr.mxu0 0.0
    %405 = vmatpush1.msra.mxu0 0.0
    %406 = vmatprep.subr.mxu0 0.0
    %407 = vmatpush1.msra.mxu0 0.0
    %408 = vmatprep.subr.mxu0 0.0
    %409 = vmatpush1.msra.mxu0 0.0
    %410 = vmatprep.subr.mxu0 0.0
    %411 = vmatpush1.msra.mxu0 0.0
    %412 = vmatprep.subr.mxu0 0.0
    %413 = vmatpush1.msra.mxu0 0.0
    %414 = vmatprep.subr.mxu0 0.0
    %415 = vmatpush1.msra.mxu0 0.0
    %416 = vmatprep.subr.mxu0 0.0
    %417 = vmatpush1.msra.mxu0 0.0
    %418 = vmatprep.subr.mxu0 0.0
    %419 = vmatpush1.msra.mxu0 0.0
    %420 = vmatprep.subr.mxu0 0.0
    %421 = vmatpush1.msra.mxu0 0.0
    %422 = vmatprep.subr.mxu0 0.0
    %423 = vmatpush1.msra.mxu0 0.0
    %424 = vmatprep.subr.mxu0 0.0
    %425 = vmatpush1.msra.mxu0 0.0
    %426 = vmatprep.subr.mxu0 0.0
    %427 = vmatpush1.msra.mxu0 0.0
    %428 = vmatprep.subr.mxu0 0.0
    %429 = vmatpush1.msra.mxu0 0.0
    %430 = vmatprep.subr.mxu0 0.0
    %431 = vmatpush1.msra.mxu0 %v395
    %432 = vmatprep.subr.mxu0 0.0
    %433 = vmatpush2.msra.mxu0 0.0
    %434 = vmatprep.subr.mxu0 0.0
    %435 = vmatpush2.msra.mxu0 0.0
    %436 = vmatprep.subr.mxu0 0.0
    %437 = vmatpush2.msra.mxu0 0.0
    %438 = vmatprep.subr.mxu0 0.0
    %439 = vmatpush2.msra.mxu0 0.0
    %440 = vmatprep.subr.mxu0 0.0
    %441 = vmatpush2.msra.mxu0 0.0
    %442 = vmatprep.subr.mxu0 0.0
    %443 = vmatpush2.msra.mxu0 0.0
    %444 = vmatprep.subr.mxu0 0.0
    %445 = vmatpush2.msra.mxu0 0.0
    %446 = vmatprep.subr.mxu0 0.0
    %447 = vmatpush2.msra.mxu0 0.0
    %448 = vmatprep.subr.mxu0 0.0
    %449 = vmatpush2.msra.mxu0 0.0
    %450 = vmatprep.subr.mxu0 0.0
    %451 = vmatpush2.msra.mxu0 0.0
    %452 = vmatprep.subr.mxu0 0.0
    %453 = vmatpush2.msra.mxu0 0.0
    %454 = vmatprep.subr.mxu0 0.0
    %455 = vmatpush2.msra.mxu0 0.0
    %456 = vmatprep.subr.mxu0 0.0
    %457 = vmatpush2.msra.mxu0 0.0
    %458 = vmatprep.subr.mxu0 0.0
    %459 = vmatpush2.msra.mxu0 0.0
    %460 = vmatprep.subr.mxu0 0.0
    %461 = vmatpush2.msra.mxu0 0.0
    %462 = vmatprep.subr.mxu0 0.0
    %463 = vmatpush2.msra.mxu0 0.0
    %464 = vmatprep.mubr.f32.mxu0 0.0
    %465 = vmatmul.mubr.f32.gmra.mxu0 %v398
    %v466 = vpop.f32.mrf.mxu0
    %v467 = vadd.f32 0.0, %v466
    %v468 = vpop.f32.mrf.mxu0
    %469 = vdwg.mxu0
    %470 = vst.msk [vmem:[#allocation7] sm:$0xff] %vm46, %v391
    %471 = vst.msk [vmem:[#allocation7 + $0x8] sm:$0xff] %vm46, %v467
    // Predicated region
    $region18: #{tpu_custom_call.1} parent=1 // pred_check
      _
    $region19: #{tpu_custom_call.1} parent=1 // pred_check_branch
      %473 = sbr.rel (0) target = $region21
    $region20: #{tpu_custom_call.1} parent=1 // pred_region
      %s475 = ssub.s32 256, 256
      %476 = vsyncadd [#allocation4], %s475
      %s477 = sshll.u32 [#allocation7], 4
      %s478 = int_to_ptr.vmem [resolvable:$true] %s477
      %483 = dma.vmem_to_hbm [thread:$0]  %s478, 256, %s2, [#allocation4], 128, 128, 8
    $region21: #{tpu_custom_call.1} parent=1 // pred_fallthru
      _
    // Predicated region
    $region22: #{tpu_custom_call.1} parent=1 // pred_check
      _
    $region23: #{tpu_custom_call.1} parent=1 // pred_check_branch
      %485 = sbr.rel (0) target = $region25
    $region24: #{tpu_custom_call.1} parent=1 // pred_region
      %486 = dma.done [#allocation4], 256
    $region25: #{tpu_custom_call.1} parent=1 // pred_fallthru
      _
    %487 = vsyncpa [#allocation3], 1
    %488 = vsyncpa [#allocation6], 1
    %489 = vsyncpa [#allocation4], 1

</llo_original>
